<compile_context>
chip_gen: v6e
topology: v6e:2x2x1
jax: 0.10.0
libtpu: 0.0.40
codegen_flags: <defaults>
</compile_context>

<pallas_src>
import math
import functools
import numpy as np
import jax
import jax.numpy as jnp
from jax.experimental import pallas as pl
from jax.experimental.pallas import tpu as pltpu


def _graph_agg_kernel(x_ref, q_ref, mask_ref,
                      wk_ref, bk_ref, wv_ref, bv_ref,
                      g_ref, gt_ref,
                      o_ref, *, scale):
    TB, S, Hp = x_ref.shape
    nH = g_ref.shape[1]

    # K / V projections on the MXU: bf16 operands, f32 accumulation, M = TB*S rows.
    x2 = x_ref[...].reshape(TB * S, Hp)                                  # bf16
    k2 = jnp.dot(x2, wk_ref[...], preferred_element_type=jnp.float32) + bk_ref[...]
    v2 = jnp.dot(x2, wv_ref[...], preferred_element_type=jnp.float32) + bv_ref[...]

    # Per-head scores via the head-grouping matrix G ([Hp, nH]):
    #   scores[b, s, h] = sum_{d in head h} q[b, d] * k[b, s, d]
    q = q_ref[...]                                                       # (TB, Hp) f32
    t2 = (k2.reshape(TB, S, Hp) * q[:, None, :]).reshape(TB * S, Hp)
    scores = jnp.dot(t2.astype(jnp.bfloat16), g_ref[...],
                     preferred_element_type=jnp.float32) * scale         # (TB*S, nH)
    scores = scores.reshape(TB, S, nH) + mask_ref[...]                   # additive mask

    # Softmax over key positions (axis=1); elementwise math stays f32.
    m = jnp.max(scores, axis=1, keepdims=True)                           # (TB, 1, nH)
    e = jnp.exp(scores - m)
    denom = jnp.sum(e, axis=1, keepdims=True)
    probs = e * pl.reciprocal(denom, approx=True)                        # (TB, S, nH)
    # TODO(synk): attention-probability dropout omitted (eval mode => identity).

    # Context: out[b, d] = sum_s probs[b, s, head(d)] * v[b, s, d]
    pfull = jnp.dot(probs.reshape(TB * S, nH).astype(jnp.bfloat16), gt_ref[...],
                    preferred_element_type=jnp.float32).reshape(TB, S, Hp)
    out = jnp.sum(pfull * v2.reshape(TB, S, Hp), axis=1)                 # (TB, Hp)

    o_ref[...] = out.astype(o_ref.dtype)


def _choose_batch_tile(bp):
    """Pick TB: multiple of 8 (sublane-dense, (8,128)-legal), as large as
    possible while keeping >=2 grid steps (dual TensorCores on v7x)."""
    for tb in (64, 32, 16, 8):
        if bp % tb == 0 and bp // tb >= 2:
            return tb
    return min(bp, 8) if bp % 8 == 0 else bp


def graph_aggregation(hidden_states, params, num_heads, attention_mask=None):
    """hidden_states: [B, S, H]; attention_mask: None, [B, S] or [B,1,1,S] additive.
    Weights are pre-transposed [H_in, H_out]. Returns [B, H] station embeddings."""
    B, S, H = hidden_states.shape
    assert H % num_heads == 0
    head_size = H // num_heads
    scale = 1.0 / math.sqrt(head_size)

    f32 = jnp.float32
    hs = hidden_states.astype(f32)

    Hp = max(128, ((H + 127) // 128) * 128)     # lane-pad hidden dim
    Bp = ((B + 7) // 8) * 8                     # sublane-pad batch
    TB = _choose_batch_tile(Bp)
    grid = Bp // TB

    # Hoisted station-query projection (well-shaped XLA GEMM, f32).
    q = hs[:, 0, :] @ params["wq"].astype(f32) + params["bq"].astype(f32)   # (B, H)

    # Normalize mask to additive [B, S], then pre-broadcast over heads so the
    # in-kernel add matches the (TB, S, nH) score layout exactly.
    if attention_mask is None:
        mask2 = jnp.zeros((B, S), f32)
    else:
        mask2 = attention_mask.astype(f32).reshape(B, S)
    mask3 = jnp.broadcast_to(mask2[:, :, None], (B, S, num_heads))

    def pad(x, shape):
        return jnp.pad(x, [(0, t - s) for s, t in zip(x.shape, shape)])

    x_p = pad(hs, (Bp, S, Hp)).astype(jnp.bfloat16)
    q_p = pad(q, (Bp, Hp))
    mask_p = pad(mask3, (Bp, S, num_heads))

    wk = pad(params["wk"].astype(f32), (Hp, Hp)).astype(jnp.bfloat16)
    wv = pad(params["wv"].astype(f32), (Hp, Hp)).astype(jnp.bfloat16)
    bk = pad(params["bk"].astype(f32).reshape(1, H), (1, Hp))
    bv = pad(params["bv"].astype(f32).reshape(1, H), (1, Hp))

    # Head-grouping matrix: G[d, h] = 1 iff feature d belongs to head h
    # (zero rows for padded feature dims d >= H).
    d = jnp.arange(Hp)
    g = (((d[:, None] // head_size) == jnp.arange(num_heads)[None, :])
         & (d[:, None] < H)).astype(jnp.bfloat16)                        # (Hp, nH)
    gt = g.T                                                             # (nH, Hp)

    # Explicit scoped-VMEM budget (double-buffered blocks + slack), capped well
    # under v7x's 64 MiB physical VMEM.
    blk_bytes = (TB * S * Hp * 2 + TB * Hp * 4 + TB * S * num_heads * 4
                 + 2 * Hp * Hp * 2 + 2 * Hp * 4 + 2 * Hp * num_heads * 2
                 + TB * Hp * 4)
    vmem_limit = int(min(max(2 * blk_bytes + (8 << 20), 32 << 20), 48 << 20))

    kernel = functools.partial(_graph_agg_kernel, scale=scale)
    wfull = lambda b: (0, 0)

    out = pl.pallas_call(
        kernel,
        out_shape=jax.ShapeDtypeStruct((Bp, Hp), jnp.float32),
        grid_spec=pltpu.PrefetchScalarGridSpec(
            num_scalar_prefetch=0,
            grid=(grid,),
            in_specs=[
                pl.BlockSpec((TB, S, Hp), lambda b: (b, 0, 0)),          # x (bf16)
                pl.BlockSpec((TB, Hp), lambda b: (b, 0)),                # q (f32)
                pl.BlockSpec((TB, S, num_heads), lambda b: (b, 0, 0)),   # mask
                pl.BlockSpec((Hp, Hp), wfull),                           # Wk (bf16)
                pl.BlockSpec((1, Hp), wfull),                            # bk
                pl.BlockSpec((Hp, Hp), wfull),                           # Wv (bf16)
                pl.BlockSpec((1, Hp), wfull),                            # bv
                pl.BlockSpec((Hp, num_heads), wfull),                    # G
                pl.BlockSpec((num_heads, Hp), wfull),                    # G^T
            ],
            out_specs=pl.BlockSpec((TB, Hp), lambda b: (b, 0)),
        ),
        compiler_params=pltpu.CompilerParams(
            dimension_semantics=("parallel",),
            vmem_limit_bytes=vmem_limit),
    )(x_p, q_p, mask_p, wk, bk, wv, bv, g, gt)

    return out[:B, :H]


def _reference(hidden_states, params, num_heads, attention_mask=None):
    """Pure-JAX reference mirroring the PyTorch GraphAggregation.forward."""
    B, S, H = hidden_states.shape
    hd = H // num_heads
    q = hidden_states[:, :1] @ params["wq"] + params["bq"]          # (B, 1, H)
    k = hidden_states @ params["wk"] + params["bk"]                 # (B, S, H)
    v = hidden_states @ params["wv"] + params["bv"]                 # (B, S, H)

    def split(x):  # (B, T, H) -> (B, nH, T, hd)
        return x.reshape(B, -1, num_heads, hd).transpose(0, 2, 1, 3)

    qh, kh, vh = split(q), split(k), split(v)
    scores = jnp.einsum("bhqd,bhkd->bhqk", qh, kh) / math.sqrt(hd)  # (B,nH,1,S)
    if attention_mask is not None:
        scores = scores + attention_mask.reshape(B, S)[:, None, None, :]
    probs = jax.nn.softmax(scores, axis=-1)
    ctx = jnp.einsum("bhqk,bhkd->bhqd", probs, vh)                  # (B,nH,1,hd)
    ctx = ctx.transpose(0, 2, 1, 3).reshape(B, 1, H)
    return ctx[:, 0, :]


if __name__ == "__main__":
    B, S, H, NH = 2, 8, 32, 4

    key = jax.random.PRNGKey(0)
    ks = jax.random.split(key, 8)
    hidden_states = jax.random.normal(ks[0], (B, S, H), jnp.float32)

    params = {
        "wq": jax.random.normal(ks[1], (H, H), jnp.float32) * 0.1,
        "bq": jax.random.normal(ks[2], (H,), jnp.float32) * 0.1,
        "wk": jax.random.normal(ks[3], (H, H), jnp.float32) * 0.1,
        "bk": jax.random.normal(ks[4], (H,), jnp.float32) * 0.1,
        "wv": jax.random.normal(ks[5], (H, H), jnp.float32) * 0.1,
        "bv": jax.random.normal(ks[6], (H,), jnp.float32) * 0.1,
    }
    # Additive attention mask (0 = keep, -1e9 = drop); last key position masked.
    attention_mask = jnp.where(jnp.arange(S)[None, :] < S - 1, 0.0, -1e9)
    attention_mask = jnp.broadcast_to(attention_mask, (B, S)).astype(jnp.float32)

    out = graph_aggregation(hidden_states, params, NH, attention_mask)
    out = jax.block_until_ready(out)

    ref = _reference(hidden_states, params, NH, attention_mask)
    np.testing.assert_allclose(np.asarray(out), np.asarray(ref),
                               rtol=2e-2, atol=2e-2)
    print("KERNEL_OK")
</pallas_src>

<mosaic_0001>
module attributes {stable_mosaic.version = 11 : i64} {
  func.func @_graph_agg_kernel(%arg0: i32, %arg1: memref<8x8x128xbf16, #tpu.memory_space<vmem>>, %arg2: memref<8x128xf32, #tpu.memory_space<vmem>>, %arg3: memref<8x8x4xf32, #tpu.memory_space<vmem>>, %arg4: memref<128x128xbf16, #tpu.memory_space<vmem>>, %arg5: memref<1x128xf32, #tpu.memory_space<vmem>>, %arg6: memref<128x128xbf16, #tpu.memory_space<vmem>>, %arg7: memref<1x128xf32, #tpu.memory_space<vmem>>, %arg8: memref<128x4xbf16, #tpu.memory_space<vmem>>, %arg9: memref<4x128xbf16, #tpu.memory_space<vmem>>, %arg10: memref<8x128xf32, #tpu.memory_space<vmem>>) attributes {dimension_semantics = [#tpu.dimension_semantics<parallel>], iteration_bounds = array<i64: 1>, scalar_prefetch = 0 : i64, scratch_operands = 0 : i64, tpu.core_type = #tpu.core_type<tc>, window_params = [{transform_indices = @transform_0, window_bounds = array<i64: 8, 8, 128>}, {transform_indices = @transform_1, window_bounds = array<i64: 8, 128>}, {transform_indices = @transform_2, window_bounds = array<i64: 8, 8, 4>}, {pipeline_mode = #tpu.pipeline_mode<synchronous>, transform_indices = @transform_3, window_bounds = array<i64: 128, 128>}, {pipeline_mode = #tpu.pipeline_mode<synchronous>, transform_indices = @transform_4, window_bounds = array<i64: 1, 128>}, {pipeline_mode = #tpu.pipeline_mode<synchronous>, transform_indices = @transform_5, window_bounds = array<i64: 128, 128>}, {pipeline_mode = #tpu.pipeline_mode<synchronous>, transform_indices = @transform_6, window_bounds = array<i64: 1, 128>}, {pipeline_mode = #tpu.pipeline_mode<synchronous>, transform_indices = @transform_7, window_bounds = array<i64: 128, 4>}, {pipeline_mode = #tpu.pipeline_mode<synchronous>, transform_indices = @transform_8, window_bounds = array<i64: 4, 128>}, {transform_indices = @transform_9, window_bounds = array<i64: 8, 128>}]} {
    %c0 = arith.constant 0 : index
    %c0_0 = arith.constant 0 : index
    %c0_1 = arith.constant 0 : index
    %0 = vector.load %arg1[%c0, %c0_0, %c0_1] : memref<8x8x128xbf16, #tpu.memory_space<vmem>>, vector<8x8x128xbf16>
    %1 = vector.shape_cast %0 : vector<8x8x128xbf16> to vector<64x128xbf16>
    %c0_2 = arith.constant 0 : index
    %c0_3 = arith.constant 0 : index
    %2 = vector.load %arg4[%c0_2, %c0_3] : memref<128x128xbf16, #tpu.memory_space<vmem>>, vector<128x128xbf16>
    %cst = arith.constant dense<0.000000e+00> : vector<64x128xf32>
    %3 = tpu.matmul %1, %2, %cst {dimension_numbers = #tpu.dot_dimension_numbers<[1], [0], [0], [1], [0, 0, 1, 1], [], []>} : vector<64x128xbf16>, vector<128x128xbf16>, vector<64x128xf32> -> vector<64x128xf32>
    %c0_4 = arith.constant 0 : index
    %c0_5 = arith.constant 0 : index
    %4 = vector.load %arg5[%c0_4, %c0_5] : memref<1x128xf32, #tpu.memory_space<vmem>>, vector<1x128xf32>
    %5 = vector.broadcast %4 : vector<1x128xf32> to vector<64x128xf32>
    %6 = arith.addf %3, %5 : vector<64x128xf32>
    %c0_6 = arith.constant 0 : index
    %c0_7 = arith.constant 0 : index
    %7 = vector.load %arg6[%c0_6, %c0_7] : memref<128x128xbf16, #tpu.memory_space<vmem>>, vector<128x128xbf16>
    %cst_8 = arith.constant dense<0.000000e+00> : vector<64x128xf32>
    %8 = tpu.matmul %1, %7, %cst_8 {dimension_numbers = #tpu.dot_dimension_numbers<[1], [0], [0], [1], [0, 0, 1, 1], [], []>} : vector<64x128xbf16>, vector<128x128xbf16>, vector<64x128xf32> -> vector<64x128xf32>
    %c0_9 = arith.constant 0 : index
    %c0_10 = arith.constant 0 : index
    %9 = vector.load %arg7[%c0_9, %c0_10] : memref<1x128xf32, #tpu.memory_space<vmem>>, vector<1x128xf32>
    %10 = vector.broadcast %9 : vector<1x128xf32> to vector<64x128xf32>
    %11 = arith.addf %8, %10 : vector<64x128xf32>
    %c0_11 = arith.constant 0 : index
    %c0_12 = arith.constant 0 : index
    %12 = vector.load %arg2[%c0_11, %c0_12] : memref<8x128xf32, #tpu.memory_space<vmem>>, vector<8x128xf32>
    %13 = vector.shape_cast %6 : vector<64x128xf32> to vector<8x8x128xf32>
    %14 = vector.shape_cast %12 : vector<8x128xf32> to vector<8x1x128xf32>
    %15 = vector.broadcast %14 : vector<8x1x128xf32> to vector<8x8x128xf32>
    %16 = arith.mulf %13, %15 : vector<8x8x128xf32>
    %17 = vector.shape_cast %16 : vector<8x8x128xf32> to vector<64x128xf32>
    %18 = arith.truncf %17 : vector<64x128xf32> to vector<64x128xbf16>
    %c0_13 = arith.constant 0 : index
    %c0_14 = arith.constant 0 : index
    %19 = vector.load %arg8[%c0_13, %c0_14] : memref<128x4xbf16, #tpu.memory_space<vmem>>, vector<128x4xbf16>
    %cst_15 = arith.constant dense<0.000000e+00> : vector<64x4xf32>
    %20 = tpu.matmul %18, %19, %cst_15 {dimension_numbers = #tpu.dot_dimension_numbers<[1], [0], [0], [1], [0, 0, 1, 1], [], []>} : vector<64x128xbf16>, vector<128x4xbf16>, vector<64x4xf32> -> vector<64x4xf32>
    %cst_16 = arith.constant 0.353553385 : f32
    %21 = vector.broadcast %cst_16 : f32 to vector<64x4xf32>
    %22 = arith.mulf %20, %21 : vector<64x4xf32>
    %23 = vector.shape_cast %22 : vector<64x4xf32> to vector<8x8x4xf32>
    %c0_17 = arith.constant 0 : index
    %c0_18 = arith.constant 0 : index
    %c0_19 = arith.constant 0 : index
    %24 = vector.load %arg3[%c0_17, %c0_18, %c0_19] : memref<8x8x4xf32, #tpu.memory_space<vmem>>, vector<8x8x4xf32>
    %25 = arith.addf %23, %24 : vector<8x8x4xf32>
    %cst_20 = arith.constant dense<0xFF800000> : vector<8x4xf32>
    %26 = vector.multi_reduction <maximumf>, %25, %cst_20 [1] : vector<8x8x4xf32> to vector<8x4xf32>
    %27 = vector.shape_cast %26 : vector<8x4xf32> to vector<8x1x4xf32>
    %28 = vector.broadcast %27 : vector<8x1x4xf32> to vector<8x8x4xf32>
    %29 = arith.subf %25, %28 : vector<8x8x4xf32>
    %30 = math.exp %29 : vector<8x8x4xf32>
    %cst_21 = arith.constant dense<0.000000e+00> : vector<8x4xf32>
    %31 = vector.multi_reduction <add>, %30, %cst_21 [1] : vector<8x8x4xf32> to vector<8x4xf32>
    %32 = vector.shape_cast %31 : vector<8x4xf32> to vector<8x1x4xf32>
    %33 = tpu.reciprocal %32 {approx = true} : vector<8x1x4xf32> -> vector<8x1x4xf32>
    %34 = vector.broadcast %33 : vector<8x1x4xf32> to vector<8x8x4xf32>
    %35 = arith.mulf %30, %34 : vector<8x8x4xf32>
    %36 = vector.shape_cast %35 : vector<8x8x4xf32> to vector<64x4xf32>
    %37 = arith.truncf %36 : vector<64x4xf32> to vector<64x4xbf16>
    %c0_22 = arith.constant 0 : index
    %c0_23 = arith.constant 0 : index
    %38 = vector.load %arg9[%c0_22, %c0_23] : memref<4x128xbf16, #tpu.memory_space<vmem>>, vector<4x128xbf16>
    %cst_24 = arith.constant dense<0.000000e+00> : vector<64x128xf32>
    %39 = tpu.matmul %37, %38, %cst_24 {dimension_numbers = #tpu.dot_dimension_numbers<[1], [0], [0], [1], [0, 0, 1, 1], [], []>} : vector<64x4xbf16>, vector<4x128xbf16>, vector<64x128xf32> -> vector<64x128xf32>
    %40 = vector.shape_cast %39 : vector<64x128xf32> to vector<8x8x128xf32>
    %41 = vector.shape_cast %11 : vector<64x128xf32> to vector<8x8x128xf32>
    %42 = arith.mulf %40, %41 : vector<8x8x128xf32>
    %cst_25 = arith.constant dense<0.000000e+00> : vector<8x128xf32>
    %43 = vector.multi_reduction <add>, %42, %cst_25 [1] : vector<8x8x128xf32> to vector<8x128xf32>
    %c0_26 = arith.constant 0 : index
    %c0_27 = arith.constant 0 : index
    %44 = vector.load %arg10[%c0_26, %c0_27] : memref<8x128xf32, #tpu.memory_space<vmem>>, vector<8x128xf32>
    tpu.vector_store %arg10[%c0_26, %c0_27], %43 {strides = array<i32>} : memref<8x128xf32, #tpu.memory_space<vmem>>, vector<8x128xf32>,
    return
  }
  func.func @transform_0(%arg0: i32) -> (i32, i32, i32) {
    %c0_i32 = arith.constant 0 : i32
    %c0_i32_0 = arith.constant 0 : i32
    %c0_i32_1 = arith.constant 0 : i32
    return %arg0, %c0_i32, %c0_i32_0 : i32, i32, i32
  }
  func.func @transform_1(%arg0: i32) -> (i32, i32) {
    %c0_i32 = arith.constant 0 : i32
    %c0_i32_0 = arith.constant 0 : i32
    return %arg0, %c0_i32 : i32, i32
  }
  func.func @transform_2(%arg0: i32) -> (i32, i32, i32) {
    %c0_i32 = arith.constant 0 : i32
    %c0_i32_0 = arith.constant 0 : i32
    %c0_i32_1 = arith.constant 0 : i32
    return %arg0, %c0_i32, %c0_i32_0 : i32, i32, i32
  }
  func.func @transform_3(%arg0: i32) -> (i32, i32) {
    %c0_i32 = arith.constant 0 : i32
    %c0_i32_0 = arith.constant 0 : i32
    %c0_i32_1 = arith.constant 0 : i32
    return %c0_i32, %c0_i32_0 : i32, i32
  }
  func.func @transform_4(%arg0: i32) -> (i32, i32) {
    %c0_i32 = arith.constant 0 : i32
    %c0_i32_0 = arith.constant 0 : i32
    %c0_i32_1 = arith.constant 0 : i32
    return %c0_i32, %c0_i32_0 : i32, i32
  }
  func.func @transform_5(%arg0: i32) -> (i32, i32) {
    %c0_i32 = arith.constant 0 : i32
    %c0_i32_0 = arith.constant 0 : i32
    %c0_i32_1 = arith.constant 0 : i32
    return %c0_i32, %c0_i32_0 : i32, i32
  }
  func.func @transform_6(%arg0: i32) -> (i32, i32) {
    %c0_i32 = arith.constant 0 : i32
    %c0_i32_0 = arith.constant 0 : i32
    %c0_i32_1 = arith.constant 0 : i32
    return %c0_i32, %c0_i32_0 : i32, i32
  }
  func.func @transform_7(%arg0: i32) -> (i32, i32) {
    %c0_i32 = arith.constant 0 : i32
    %c0_i32_0 = arith.constant 0 : i32
    %c0_i32_1 = arith.constant 0 : i32
    return %c0_i32, %c0_i32_0 : i32, i32
  }
  func.func @transform_8(%arg0: i32) -> (i32, i32) {
    %c0_i32 = arith.constant 0 : i32
    %c0_i32_0 = arith.constant 0 : i32
    %c0_i32_1 = arith.constant 0 : i32
    return %c0_i32, %c0_i32_0 : i32, i32
  }
  func.func @transform_9(%arg0: i32) -> (i32, i32) {
    %c0_i32 = arith.constant 0 : i32
    %c0_i32_0 = arith.constant 0 : i32
    return %arg0, %c0_i32 : i32, i32
  }
}

</mosaic_0001>

<llo_original>
// kernel: tpu_custom_call.1
$region0: #{tpu_custom_call.1}
  #allocation0 [shape = 'u32[]', space=smem, size = 0x4, offset = 0x4, fixed_abs, tag = 'smem constant byte address 0x4 - core index']
  #allocation1 [shape = 'u32[144,128]{1,0:T(1,128)}', space=vmem, size = 0x12000, scoped, tag = 'internal scratch']
  %s0 = inlined_call_operand.vmem [shape: bf16[8,8,128], index: 0, kind: input, shape index: {}]
  %s1 = inlined_call_operand.hbm [shape: f32[8,128], index: 1, kind: input, shape index: {}]
  %s2 = inlined_call_operand.vmem [shape: f32[8,8,4], index: 2, kind: input, shape index: {}]
  %s3 = inlined_call_operand.vmem [shape: bf16[128,128], index: 3, kind: input, shape index: {}]
  %s4 = inlined_call_operand.vmem [shape: f32[1,128], index: 4, kind: input, shape index: {}]
  %s5 = inlined_call_operand.vmem [shape: bf16[128,128], index: 5, kind: input, shape index: {}]
  %s6 = inlined_call_operand.vmem [shape: f32[1,128], index: 6, kind: input, shape index: {}]
  %s7 = inlined_call_operand.vmem [shape: bf16[128,4], index: 7, kind: input, shape index: {}]
  %s8 = inlined_call_operand.vmem [shape: bf16[4,128], index: 8, kind: input, shape index: {}]
  %s9 = inlined_call_operand.hbm [shape: f32[8,128], index: 9, kind: output, shape index: {}]
  %s10 = sld [smem:[#allocation0]]
  $region50: #{tpu_custom_call.1} parent=0
    _
  %s12 = ssub.s32 1, %s10
  %s13 = scalar_select 0, %s12, %s10
  $region1: #{tpu_custom_call.1} parent=0
    #allocation2 [shape = 'u8[4096]{0}', space=vmem, size = 0x1000, scoped, tag = 'input window, operand 1, single buffered']
    #allocation3 [shape = 's32[1]{0}', space=sflag, size = 0x4, scoped, tag = 'scoped memory for tpu_custom_call.1']
    #allocation4 [shape = 's32[1]{0}', space=sflag, size = 0x4, scoped, tag = 'scoped memory for tpu_custom_call.1']
    #allocation5 [shape = 'u8[4096]{0}', space=vmem, size = 0x1000, scoped, tag = 'output window, operand 0, single buffered']
    %14 = vsyncpa [#allocation3], 0
    %15 = vsyncpa [#allocation4], 0
    // Predicated region
    $region2: #{tpu_custom_call.1} parent=1 // pred_check
      _
    $region3: #{tpu_custom_call.1} parent=1 // pred_check_branch
      %17 = sbr.rel (0) target = $region5
    $region4: #{tpu_custom_call.1} parent=1 // pred_region
      _
    $region5: #{tpu_custom_call.1} parent=1 // pred_fallthru
      _
    // Predicated region
    $region6: #{tpu_custom_call.1} parent=1 // pred_check
      _
    $region7: #{tpu_custom_call.1} parent=1 // pred_check_branch
      %19 = sbr.rel (0) target = $region9
    $region8: #{tpu_custom_call.1} parent=1 // pred_region
      %s21 = ssub.s32 128, 128
      %22 = vsyncadd [#allocation3], %s21
      %s24 = sshll.u32 [#allocation2], 4
      %s25 = int_to_ptr.vmem [resolvable:$true] %s24
      %27 = dma.hbm_to_vmem [thread:$0]  %s1, 128, %s25, [#allocation3]
    $region9: #{tpu_custom_call.1} parent=1 // pred_fallthru
      _
    // Predicated region
    $region10: #{tpu_custom_call.1} parent=1 // pred_check
      _
    $region11: #{tpu_custom_call.1} parent=1 // pred_check_branch
      %29 = sbr.rel (0) target = $region13
    $region12: #{tpu_custom_call.1} parent=1 // pred_region
      _
    $region13: #{tpu_custom_call.1} parent=1 // pred_fallthru
      _
    // Predicated region
    $region14: #{tpu_custom_call.1} parent=1 // pred_check
      _
    $region15: #{tpu_custom_call.1} parent=1 // pred_check_branch
      %31 = sbr.rel (0) target = $region17
    $region16: #{tpu_custom_call.1} parent=1 // pred_region
      _
    $region17: #{tpu_custom_call.1} parent=1 // pred_fallthru
      _
    // Predicated region
    $region18: #{tpu_custom_call.1} parent=1 // pred_check
      _
    $region19: #{tpu_custom_call.1} parent=1 // pred_check_branch
      %33 = sbr.rel (0) target = $region21
    $region20: #{tpu_custom_call.1} parent=1 // pred_region
      _
    $region21: #{tpu_custom_call.1} parent=1 // pred_fallthru
      _
    // Predicated region
    $region22: #{tpu_custom_call.1} parent=1 // pred_check
      _
    $region23: #{tpu_custom_call.1} parent=1 // pred_check_branch
      %35 = sbr.rel (0) target = $region25
    $region24: #{tpu_custom_call.1} parent=1 // pred_region
      _
    $region25: #{tpu_custom_call.1} parent=1 // pred_fallthru
      _
    // Predicated region
    $region26: #{tpu_custom_call.1} parent=1 // pred_check
      _
    $region27: #{tpu_custom_call.1} parent=1 // pred_check_branch
      %37 = sbr.rel (0) target = $region29
    $region28: #{tpu_custom_call.1} parent=1 // pred_region
      _
    $region29: #{tpu_custom_call.1} parent=1 // pred_fallthru
      _
    // Predicated region
    $region30: #{tpu_custom_call.1} parent=1 // pred_check
      _
    $region31: #{tpu_custom_call.1} parent=1 // pred_check_branch
      %39 = sbr.rel (0) target = $region33
    $region32: #{tpu_custom_call.1} parent=1 // pred_region
      _
    $region33: #{tpu_custom_call.1} parent=1 // pred_fallthru
      _
    // Predicated region
    $region34: #{tpu_custom_call.1} parent=1 // pred_check
      _
    $region35: #{tpu_custom_call.1} parent=1 // pred_check_branch
      %41 = sbr.rel (0) target = $region37
    $region36: #{tpu_custom_call.1} parent=1 // pred_region
      _
    $region37: #{tpu_custom_call.1} parent=1 // pred_fallthru
      _
    // Predicated region
    $region38: #{tpu_custom_call.1} parent=1 // pred_check
      _
    $region39: #{tpu_custom_call.1} parent=1 // pred_check_branch
      %43 = sbr.rel (0) target = $region41
    $region40: #{tpu_custom_call.1} parent=1 // pred_region
      %44 = dma.done [#allocation3], 128
    $region41: #{tpu_custom_call.1} parent=1 // pred_fallthru
      _
    %v46 = vld [vmem:[%s0] sm:$0xf]
    %v47 = vld [vmem:[%s0 + $0x4] sm:$0xf]
    %v48 = vld [vmem:[%s0 + $0x8] sm:$0xf]
    %v49 = vld [vmem:[%s0 + $0xc] sm:$0xf]
    %v50 = vld [vmem:[%s0 + $0x10] sm:$0xf]
    %v51 = vld [vmem:[%s0 + $0x14] sm:$0xf]
    %v52 = vld [vmem:[%s0 + $0x18] sm:$0xf]
    %v53 = vld [vmem:[%s0 + $0x1c] sm:$0xf]
    %v54 = vld [vmem:[%s3] sm:$0xf]
    %v55 = vld [vmem:[%s3 + $0x4] sm:$0xf]
    %v56 = vld [vmem:[%s3 + $0x8] sm:$0xf]
    %v57 = vld [vmem:[%s3 + $0xc] sm:$0xf]
    %v58 = vld [vmem:[%s3 + $0x10] sm:$0xf]
    %v59 = vld [vmem:[%s3 + $0x14] sm:$0xf]
    %v60 = vld [vmem:[%s3 + $0x18] sm:$0xf]
    %v61 = vld [vmem:[%s3 + $0x1c] sm:$0xf]
    %v62 = vld [vmem:[%s3 + $0x20] sm:$0xf]
    %v63 = vld [vmem:[%s3 + $0x24] sm:$0xf]
    %v64 = vld [vmem:[%s3 + $0x28] sm:$0xf]
    %v65 = vld [vmem:[%s3 + $0x2c] sm:$0xf]
    %v66 = vld [vmem:[%s3 + $0x30] sm:$0xf]
    %v67 = vld [vmem:[%s3 + $0x34] sm:$0xf]
    %v68 = vld [vmem:[%s3 + $0x38] sm:$0xf]
    %v69 = vld [vmem:[%s3 + $0x3c] sm:$0xf]
    %v70 = vld [vmem:[%s4] sm:$0x1]
    %v72 = vlaneseq
    %v73 = vshrl.u32 %v72, 7
    %v74 = vsub.s32 0, %v73
    %v75 = vrot.slane %v70, %v74
    %v85 = vunpack.c.l.b16 %v46
    %v86 = vunpack.c.l.b16 %v47
    %v87 = vunpack.c.l.b16 %v48
    %v88 = vunpack.c.l.b16 %v49
    %v89 = vunpack.c.l.b16 %v50
    %v90 = vunpack.c.l.b16 %v51
    %v91 = vunpack.c.l.b16 %v52
    %v92 = vunpack.c.l.b16 %v53
    %v93 = vpack.c.b16 %v86, %v85
    %v94 = vpack.c.b16 %v88, %v87
    %v95 = vpack.c.b16 %v90, %v89
    %v96 = vpack.c.b16 %v92, %v91
    %v117 = vunpack.c.l.b16 %v54
    %v118 = vunpack.c.l.b16 %v55
    %v119 = vunpack.c.l.b16 %v56
    %v120 = vunpack.c.l.b16 %v57
    %v121 = vunpack.c.l.b16 %v58
    %v122 = vunpack.c.l.b16 %v59
    %v123 = vunpack.c.l.b16 %v60
    %v124 = vunpack.c.l.b16 %v61
    %v125 = vunpack.c.l.b16 %v62
    %v126 = vunpack.c.l.b16 %v63
    %v127 = vunpack.c.l.b16 %v64
    %v128 = vunpack.c.l.b16 %v65
    %v129 = vunpack.c.l.b16 %v66
    %v130 = vunpack.c.l.b16 %v67
    %v131 = vunpack.c.l.b16 %v68
    %v132 = vunpack.c.l.b16 %v69
    %v133 = vpack.c.b16 %v118, %v117
    %v134 = vpack.c.b16 %v120, %v119
    %v135 = vpack.c.b16 %v122, %v121
    %v136 = vpack.c.b16 %v124, %v123
    %v137 = vpack.c.b16 %v126, %v125
    %v138 = vpack.c.b16 %v128, %v127
    %v139 = vpack.c.b16 %v130, %v129
    %v140 = vpack.c.b16 %v132, %v131
    %149 = vmatprep.subr.bf16.mxu0 0
    %150 = vmatpush1.bf16.msra.mxu0 %v140
    %151 = vmatprep.subr.bf16.mxu0 0
    %152 = vmatpush1.bf16.msra.mxu0 %v139
    %153 = vmatprep.subr.bf16.mxu0 0
    %154 = vmatpush1.bf16.msra.mxu0 %v138
    %155 = vmatprep.subr.bf16.mxu0 0
    %156 = vmatpush1.bf16.msra.mxu0 %v137
    %157 = vmatprep.subr.bf16.mxu0 0
    %158 = vmatpush1.bf16.msra.mxu0 %v136
    %159 = vmatprep.subr.bf16.mxu0 0
    %160 = vmatpush1.bf16.msra.mxu0 %v135
    %161 = vmatprep.subr.bf16.mxu0 0
    %162 = vmatpush1.bf16.msra.mxu0 %v134
    %163 = vmatprep.subr.bf16.mxu0 0
    %164 = vmatpush1.bf16.msra.mxu0 %v133
    %165 = vmatprep.subr.bf16.mxu0 0
    %166 = vmatpush2.bf16.msra.mxu0 0
    %167 = vmatprep.subr.bf16.mxu0 0
    %168 = vmatpush2.bf16.msra.mxu0 0
    %169 = vmatprep.subr.bf16.mxu0 0
    %170 = vmatpush2.bf16.msra.mxu0 0
    %171 = vmatprep.subr.bf16.mxu0 0
    %172 = vmatpush2.bf16.msra.mxu0 0
    %173 = vmatprep.subr.bf16.mxu0 0
    %174 = vmatpush2.bf16.msra.mxu0 0
    %175 = vmatprep.subr.bf16.mxu0 0
    %176 = vmatpush2.bf16.msra.mxu0 0
    %177 = vmatprep.subr.bf16.mxu0 0
    %178 = vmatpush2.bf16.msra.mxu0 0
    %179 = vmatprep.subr.bf16.mxu0 0
    %180 = vmatpush2.bf16.msra.mxu0 0
    %181 = vmatprep.mubr.bf16.mxu0 0
    %182 = vmatmul.mubr.bf16.gmra.mxu0 %v93
    %v183 = vpop.f32.mrf.mxu0
    %v184 = vadd.f32 %v75, %v183
    %v185 = vpop.f32.mrf.mxu0
    %v186 = vpop.f32.mrf.mxu0
    %v187 = vadd.f32 %v75, %v186
    %v188 = vpop.f32.mrf.mxu0
    %189 = vmatprep.mubr.bf16.mxu0 0
    %190 = vmatmul.mubr.bf16.gmra.mxu0 %v94
    %v191 = vpop.f32.mrf.mxu0
    %v192 = vadd.f32 %v75, %v191
    %v193 = vpop.f32.mrf.mxu0
    %v194 = vpop.f32.mrf.mxu0
    %v195 = vadd.f32 %v75, %v194
    %v196 = vpop.f32.mrf.mxu0
    %197 = vmatprep.mubr.bf16.mxu0 0
    %198 = vmatmul.mubr.bf16.gmra.mxu0 %v95
    %v199 = vpop.f32.mrf.mxu0
    %v200 = vadd.f32 %v75, %v199
    %v201 = vpop.f32.mrf.mxu0
    %v202 = vpop.f32.mrf.mxu0
    %v203 = vadd.f32 %v75, %v202
    %v204 = vpop.f32.mrf.mxu0
    %205 = vmatprep.mubr.bf16.mxu0 0
    %206 = vmatmul.mubr.bf16.gmra.mxu0 %v96
    %v207 = vpop.f32.mrf.mxu0
    %v208 = vadd.f32 %v75, %v207
    %v209 = vpop.f32.mrf.mxu0
    %v210 = vpop.f32.mrf.mxu0
    %v211 = vadd.f32 %v75, %v210
    %v212 = vpop.f32.mrf.mxu0
    %213 = vdwg.mxu0
    %v214 = vld [vmem:[%s5] sm:$0xf]
    %v215 = vld [vmem:[%s5 + $0x4] sm:$0xf]
    %v216 = vld [vmem:[%s5 + $0x8] sm:$0xf]
    %v217 = vld [vmem:[%s5 + $0xc] sm:$0xf]
    %v218 = vld [vmem:[%s5 + $0x10] sm:$0xf]
    %v219 = vld [vmem:[%s5 + $0x14] sm:$0xf]
    %v220 = vld [vmem:[%s5 + $0x18] sm:$0xf]
    %v221 = vld [vmem:[%s5 + $0x1c] sm:$0xf]
    %v222 = vld [vmem:[%s5 + $0x20] sm:$0xf]
    %v223 = vld [vmem:[%s5 + $0x24] sm:$0xf]
    %v224 = vld [vmem:[%s5 + $0x28] sm:$0xf]
    %v225 = vld [vmem:[%s5 + $0x2c] sm:$0xf]
    %v226 = vld [vmem:[%s5 + $0x30] sm:$0xf]
    %v227 = vld [vmem:[%s5 + $0x34] sm:$0xf]
    %v228 = vld [vmem:[%s5 + $0x38] sm:$0xf]
    %v229 = vld [vmem:[%s5 + $0x3c] sm:$0xf]
    %v230 = vld [vmem:[%s6] sm:$0x1]
    %v232 = vlaneseq
    %v233 = vshrl.u32 %v232, 7
    %v234 = vsub.s32 0, %v233
    %v235 = vrot.slane %v230, %v234
    %v253 = vunpack.c.l.b16 %v214
    %v254 = vunpack.c.l.b16 %v215
    %v255 = vunpack.c.l.b16 %v216
    %v256 = vunpack.c.l.b16 %v217
    %v257 = vunpack.c.l.b16 %v218
    %v258 = vunpack.c.l.b16 %v219
    %v259 = vunpack.c.l.b16 %v220
    %v260 = vunpack.c.l.b16 %v221
    %v261 = vunpack.c.l.b16 %v222
    %v262 = vunpack.c.l.b16 %v223
    %v263 = vunpack.c.l.b16 %v224
    %v264 = vunpack.c.l.b16 %v225
    %v265 = vunpack.c.l.b16 %v226
    %v266 = vunpack.c.l.b16 %v227
    %v267 = vunpack.c.l.b16 %v228
    %v268 = vunpack.c.l.b16 %v229
    %v269 = vpack.c.b16 %v254, %v253
    %v270 = vpack.c.b16 %v256, %v255
    %v271 = vpack.c.b16 %v258, %v257
    %v272 = vpack.c.b16 %v260, %v259
    %v273 = vpack.c.b16 %v262, %v261
    %v274 = vpack.c.b16 %v264, %v263
    %v275 = vpack.c.b16 %v266, %v265
    %v276 = vpack.c.b16 %v268, %v267
    %285 = vmatprep.subr.bf16.mxu0 0
    %286 = vmatpush1.bf16.msra.mxu0 %v276
    %287 = vmatprep.subr.bf16.mxu0 0
    %288 = vmatpush1.bf16.msra.mxu0 %v275
    %289 = vmatprep.subr.bf16.mxu0 0
    %290 = vmatpush1.bf16.msra.mxu0 %v274
    %291 = vmatprep.subr.bf16.mxu0 0
    %292 = vmatpush1.bf16.msra.mxu0 %v273
    %293 = vmatprep.subr.bf16.mxu0 0
    %294 = vmatpush1.bf16.msra.mxu0 %v272
    %295 = vmatprep.subr.bf16.mxu0 0
    %296 = vmatpush1.bf16.msra.mxu0 %v271
    %297 = vmatprep.subr.bf16.mxu0 0
    %298 = vmatpush1.bf16.msra.mxu0 %v270
    %299 = vmatprep.subr.bf16.mxu0 0
    %300 = vmatpush1.bf16.msra.mxu0 %v269
    %301 = vmatprep.subr.bf16.mxu0 0
    %302 = vmatpush2.bf16.msra.mxu0 0
    %303 = vmatprep.subr.bf16.mxu0 0
    %304 = vmatpush2.bf16.msra.mxu0 0
    %305 = vmatprep.subr.bf16.mxu0 0
    %306 = vmatpush2.bf16.msra.mxu0 0
    %307 = vmatprep.subr.bf16.mxu0 0
    %308 = vmatpush2.bf16.msra.mxu0 0
    %309 = vmatprep.subr.bf16.mxu0 0
    %310 = vmatpush2.bf16.msra.mxu0 0
    %311 = vmatprep.subr.bf16.mxu0 0
    %312 = vmatpush2.bf16.msra.mxu0 0
    %313 = vmatprep.subr.bf16.mxu0 0
    %314 = vmatpush2.bf16.msra.mxu0 0
    %315 = vmatprep.subr.bf16.mxu0 0
    %316 = vmatpush2.bf16.msra.mxu0 0
    %317 = vmatprep.mubr.bf16.mxu0 0
    %318 = vmatmul.mubr.bf16.gmra.mxu0 %v93
    %v319 = vpop.f32.mrf.mxu0
    %v320 = vadd.f32 %v235, %v319
    %v321 = vpop.f32.mrf.mxu0
    %v322 = vpop.f32.mrf.mxu0
    %v323 = vadd.f32 %v235, %v322
    %v324 = vpop.f32.mrf.mxu0
    %325 = vmatprep.mubr.bf16.mxu0 0
    %326 = vmatmul.mubr.bf16.gmra.mxu0 %v94
    %v327 = vpop.f32.mrf.mxu0
    %v328 = vadd.f32 %v235, %v327
    %v329 = vpop.f32.mrf.mxu0
    %v330 = vpop.f32.mrf.mxu0
    %v331 = vadd.f32 %v235, %v330
    %v332 = vpop.f32.mrf.mxu0
    %333 = vmatprep.mubr.bf16.mxu0 0
    %334 = vmatmul.mubr.bf16.gmra.mxu0 %v95
    %v335 = vpop.f32.mrf.mxu0
    %v336 = vadd.f32 %v235, %v335
    %v337 = vpop.f32.mrf.mxu0
    %v338 = vpop.f32.mrf.mxu0
    %v339 = vadd.f32 %v235, %v338
    %v340 = vpop.f32.mrf.mxu0
    %341 = vmatprep.mubr.bf16.mxu0 0
    %342 = vmatmul.mubr.bf16.gmra.mxu0 %v96
    %v343 = vpop.f32.mrf.mxu0
    %v344 = vadd.f32 %v235, %v343
    %v345 = vpop.f32.mrf.mxu0
    %v346 = vpop.f32.mrf.mxu0
    %v347 = vadd.f32 %v235, %v346
    %v348 = vpop.f32.mrf.mxu0
    %349 = vdwg.mxu0
    %v350 = vld [vmem:[#allocation2] sm:$0xff]
    %v352 = vcombine.high %v350, %v350
    %v354 = vunpack.c.l.s4 1966171168
    %v355 = vunpack.c.0.s8 %v354
    %v356 = vlaneseq
    %v357 = vshrl.u32 %v356, 7
    %v358 = vsub.s32 %v355, %v357
    %v359 = vrot.slane %v350, %v358
    %v361 = vunpack.c.l.s4 1966171168
    %v362 = vunpack.c.0.s8 %v361
    %v363 = vlaneseq
    %v364 = vshrl.u32 %v363, 7
    %v365 = vsub.s32 %v362, %v364
    %v366 = vrot.slane %v352, %v365
    %v367 = vcombine.high %v359, %v359
    %v368 = vcombine.high %v366, %v366
    %v370 = vunpack.c.l.s4 1966171168
    %v371 = vunpack.c.0.s8 %v370
    %v372 = vlaneseq
    %v373 = vshrl.u32 %v372, 7
    %v374 = vsub.s32 %v371, %v373
    %v375 = vrot.slane %v359, %v374
    %v377 = vunpack.c.l.s4 1966171168
    %v378 = vunpack.c.0.s8 %v377
    %v379 = vlaneseq
    %v380 = vshrl.u32 %v379, 7
    %v381 = vsub.s32 %v378, %v380
    %v382 = vrot.slane %v366, %v381
    %v384 = vunpack.c.l.s4 1966171168
    %v385 = vunpack.c.0.s8 %v384
    %v386 = vlaneseq
    %v387 = vshrl.u32 %v386, 7
    %v388 = vsub.s32 %v385, %v387
    %v389 = vrot.slane %v367, %v388
    %v391 = vunpack.c.l.s4 1966171168
    %v392 = vunpack.c.0.s8 %v391
    %v393 = vlaneseq
    %v394 = vshrl.u32 %v393, 7
    %v395 = vsub.s32 %v392, %v394
    %v396 = vrot.slane %v368, %v395
    %v397 = vcombine.high %v375, %v375
    %v398 = vcombine.high %v382, %v382
    %v399 = vcombine.high %v389, %v389
    %v400 = vcombine.high %v396, %v396
    %v401 = vlaneseq
    %v402 = vshrl.u32 %v401, 7
    %v403 = vsub.s32 0, %v402
    %v404 = vrot.slane %v375, %v403
    %v405 = vlaneseq
    %v406 = vshrl.u32 %v405, 7
    %v407 = vsub.s32 0, %v406
    %v408 = vrot.slane %v389, %v407
    %v409 = vlaneseq
    %v410 = vshrl.u32 %v409, 7
    %v411 = vsub.s32 0, %v410
    %v412 = vrot.slane %v397, %v411
    %v413 = vlaneseq
    %v414 = vshrl.u32 %v413, 7
    %v415 = vsub.s32 0, %v414
    %v416 = vrot.slane %v399, %v415
    %v417 = vlaneseq
    %v418 = vshrl.u32 %v417, 7
    %v419 = vsub.s32 0, %v418
    %v420 = vrot.slane %v382, %v419
    %v421 = vlaneseq
    %v422 = vshrl.u32 %v421, 7
    %v423 = vsub.s32 0, %v422
    %v424 = vrot.slane %v396, %v423
    %v425 = vlaneseq
    %v426 = vshrl.u32 %v425, 7
    %v427 = vsub.s32 0, %v426
    %v428 = vrot.slane %v398, %v427
    %v429 = vlaneseq
    %v430 = vshrl.u32 %v429, 7
    %v431 = vsub.s32 0, %v430
    %v432 = vrot.slane %v400, %v431
    %v441 = vmul.f32 %v184, %v404
    %v442 = vmul.f32 %v187, %v408
    %v443 = vmul.f32 %v192, %v412
    %v444 = vmul.f32 %v195, %v416
    %v445 = vmul.f32 %v200, %v420
    %v446 = vmul.f32 %v203, %v424
    %v447 = vmul.f32 %v208, %v428
    %v448 = vmul.f32 %v211, %v432
    %v449 = vpack.c.bf16 %v442, %v441
    %v450 = vpack.c.bf16 %v444, %v443
    %v451 = vpack.c.bf16 %v446, %v445
    %v452 = vpack.c.bf16 %v448, %v447
    %v453 = vld [vmem:[%s7] sm:$0xf]
    %v454 = vld [vmem:[%s7 + $0x4] sm:$0xf]
    %v455 = vld [vmem:[%s7 + $0x8] sm:$0xf]
    %v456 = vld [vmem:[%s7 + $0xc] sm:$0xf]
    %v457 = vld [vmem:[%s7 + $0x10] sm:$0xf]
    %v458 = vld [vmem:[%s7 + $0x14] sm:$0xf]
    %v459 = vld [vmem:[%s7 + $0x18] sm:$0xf]
    %v460 = vld [vmem:[%s7 + $0x1c] sm:$0xf]
    %v461 = vld [vmem:[%s7 + $0x20] sm:$0xf]
    %v462 = vld [vmem:[%s7 + $0x24] sm:$0xf]
    %v463 = vld [vmem:[%s7 + $0x28] sm:$0xf]
    %v464 = vld [vmem:[%s7 + $0x2c] sm:$0xf]
    %v465 = vld [vmem:[%s7 + $0x30] sm:$0xf]
    %v466 = vld [vmem:[%s7 + $0x34] sm:$0xf]
    %v467 = vld [vmem:[%s7 + $0x38] sm:$0xf]
    %v468 = vld [vmem:[%s7 + $0x3c] sm:$0xf]
    %v485 = vunpack.c.l.b16 %v453
    %v486 = vunpack.c.l.b16 %v454
    %v487 = vunpack.c.l.b16 %v455
    %v488 = vunpack.c.l.b16 %v456
    %v489 = vunpack.c.l.b16 %v457
    %v490 = vunpack.c.l.b16 %v458
    %v491 = vunpack.c.l.b16 %v459
    %v492 = vunpack.c.l.b16 %v460
    %v493 = vunpack.c.l.b16 %v461
    %v494 = vunpack.c.l.b16 %v462
    %v495 = vunpack.c.l.b16 %v463
    %v496 = vunpack.c.l.b16 %v464
    %v497 = vunpack.c.l.b16 %v465
    %v498 = vunpack.c.l.b16 %v466
    %v499 = vunpack.c.l.b16 %v467
    %v500 = vunpack.c.l.b16 %v468
    %v501 = vpack.c.b16 %v486, %v485
    %v502 = vpack.c.b16 %v488, %v487
    %v503 = vpack.c.b16 %v490, %v489
    %v504 = vpack.c.b16 %v492, %v491
    %v505 = vpack.c.b16 %v494, %v493
    %v506 = vpack.c.b16 %v496, %v495
    %v507 = vpack.c.b16 %v498, %v497
    %v508 = vpack.c.b16 %v500, %v499
    %517 = vmatprep.subr.bf16.mxu0 0
    %518 = vmatpush1.bf16.msra.mxu0 %v508
    %519 = vmatprep.subr.bf16.mxu0 0
    %520 = vmatpush1.bf16.msra.mxu0 %v507
    %521 = vmatprep.subr.bf16.mxu0 0
    %522 = vmatpush1.bf16.msra.mxu0 %v506
    %523 = vmatprep.subr.bf16.mxu0 0
    %524 = vmatpush1.bf16.msra.mxu0 %v505
    %525 = vmatprep.subr.bf16.mxu0 0
    %526 = vmatpush1.bf16.msra.mxu0 %v504
    %527 = vmatprep.subr.bf16.mxu0 0
    %528 = vmatpush1.bf16.msra.mxu0 %v503
    %529 = vmatprep.subr.bf16.mxu0 0
    %530 = vmatpush1.bf16.msra.mxu0 %v502
    %531 = vmatprep.subr.bf16.mxu0 0
    %532 = vmatpush1.bf16.msra.mxu0 %v501
    %533 = vmatprep.subr.bf16.mxu0 0
    %534 = vmatpush2.bf16.msra.mxu0 0
    %535 = vmatprep.subr.bf16.mxu0 0
    %536 = vmatpush2.bf16.msra.mxu0 0
    %537 = vmatprep.subr.bf16.mxu0 0
    %538 = vmatpush2.bf16.msra.mxu0 0
    %539 = vmatprep.subr.bf16.mxu0 0
    %540 = vmatpush2.bf16.msra.mxu0 0
    %541 = vmatprep.subr.bf16.mxu0 0
    %542 = vmatpush2.bf16.msra.mxu0 0
    %543 = vmatprep.subr.bf16.mxu0 0
    %544 = vmatpush2.bf16.msra.mxu0 0
    %545 = vmatprep.subr.bf16.mxu0 0
    %546 = vmatpush2.bf16.msra.mxu0 0
    %547 = vmatprep.subr.bf16.mxu0 0
    %548 = vmatpush2.bf16.msra.mxu0 0
    %549 = vmatprep.mubr.bf16.mxu0 0
    %550 = vmatmul.mubr.bf16.gmra.mxu0 %v449
    %v551 = vpop.f32.mrf.mxu0
    %v552 = vadd.f32 0.0, %v551
    %v553 = vpop.f32.mrf.mxu0
    %v554 = vpop.f32.mrf.mxu0
    %v555 = vadd.f32 0.0, %v554
    %v556 = vpop.f32.mrf.mxu0
    %557 = vmatprep.mubr.bf16.mxu0 0
    %558 = vmatmul.mubr.bf16.gmra.mxu0 %v450
    %v559 = vpop.f32.mrf.mxu0
    %v560 = vadd.f32 0.0, %v559
    %v561 = vpop.f32.mrf.mxu0
    %v562 = vpop.f32.mrf.mxu0
    %v563 = vadd.f32 0.0, %v562
    %v564 = vpop.f32.mrf.mxu0
    %565 = vmatprep.mubr.bf16.mxu0 0
    %566 = vmatmul.mubr.bf16.gmra.mxu0 %v451
    %v567 = vpop.f32.mrf.mxu0
    %v568 = vadd.f32 0.0, %v567
    %v569 = vpop.f32.mrf.mxu0
    %v570 = vpop.f32.mrf.mxu0
    %v571 = vadd.f32 0.0, %v570
    %v572 = vpop.f32.mrf.mxu0
    %573 = vmatprep.mubr.bf16.mxu0 0
    %574 = vmatmul.mubr.bf16.gmra.mxu0 %v452
    %v575 = vpop.f32.mrf.mxu0
    %v576 = vadd.f32 0.0, %v575
    %v577 = vpop.f32.mrf.mxu0
    %v578 = vpop.f32.mrf.mxu0
    %v579 = vadd.f32 0.0, %v578
    %v580 = vpop.f32.mrf.mxu0
    %581 = vdwg.mxu0
    %v582 = vmul.f32 %v552, 0.35355338
    %v583 = vmul.f32 %v555, 0.35355338
    %v584 = vmul.f32 %v560, 0.35355338
    %v585 = vmul.f32 %v563, 0.35355338
    %v586 = vmul.f32 %v568, 0.35355338
    %v587 = vmul.f32 %v571, 0.35355338
    %v588 = vmul.f32 %v576, 0.35355338
    %v589 = vmul.f32 %v579, 0.35355338
    %v590 = vld [vmem:[%s2] sm:$0xff]
    %v591 = vld [vmem:[%s2 + $0x8] sm:$0xff]
    %v592 = vld [vmem:[%s2 + $0x10] sm:$0xff]
    %v593 = vld [vmem:[%s2 + $0x18] sm:$0xff]
    %v594 = vld [vmem:[%s2 + $0x20] sm:$0xff]
    %v595 = vld [vmem:[%s2 + $0x28] sm:$0xff]
    %v596 = vld [vmem:[%s2 + $0x30] sm:$0xff]
    %v597 = vld [vmem:[%s2 + $0x38] sm:$0xff]
    %v598 = vadd.f32 %v582, %v590
    %v599 = vadd.f32 %v583, %v591
    %v600 = vadd.f32 %v584, %v592
    %v601 = vadd.f32 %v585, %v593
    %v602 = vadd.f32 %v586, %v594
    %v603 = vadd.f32 %v587, %v595
    %v604 = vadd.f32 %v588, %v596
    %v605 = vadd.f32 %v589, %v597
    %vm606 = vcmask 31744
    %v607 = vsel %vm606, %v598, -inf
    %v608 = vrot.slane %v607, 4
    %v609 = vmax.f32 %v607, %v608
    %v610 = vrot.slane %v609, 2
    %v611 = vmax.f32 %v609, %v610
    %v612 = vrot.slane %v611, 1
    %v613 = vmax.f32 %v611, %v612
    %v614 = vsel %vm606, %v599, -inf
    %v615 = vrot.slane %v614, 4
    %v616 = vmax.f32 %v614, %v615
    %v617 = vrot.slane %v616, 2
    %v618 = vmax.f32 %v616, %v617
    %v619 = vrot.slane %v618, 1
    %v620 = vmax.f32 %v618, %v619
    %v621 = vsel %vm606, %v600, -inf
    %v622 = vrot.slane %v621, 4
    %v623 = vmax.f32 %v621, %v622
    %v624 = vrot.slane %v623, 2
    %v625 = vmax.f32 %v623, %v624
    %v626 = vrot.slane %v625, 1
    %v627 = vmax.f32 %v625, %v626
    %v628 = vsel %vm606, %v601, -inf
    %v629 = vrot.slane %v628, 4
    %v630 = vmax.f32 %v628, %v629
    %v631 = vrot.slane %v630, 2
    %v632 = vmax.f32 %v630, %v631
    %v633 = vrot.slane %v632, 1
    %v634 = vmax.f32 %v632, %v633
    %v635 = vsel %vm606, %v602, -inf
    %v636 = vrot.slane %v635, 4
    %v637 = vmax.f32 %v635, %v636
    %v638 = vrot.slane %v637, 2
    %v639 = vmax.f32 %v637, %v638
    %v640 = vrot.slane %v639, 1
    %v641 = vmax.f32 %v639, %v640
    %v642 = vsel %vm606, %v603, -inf
    %v643 = vrot.slane %v642, 4
    %v644 = vmax.f32 %v642, %v643
    %v645 = vrot.slane %v644, 2
    %v646 = vmax.f32 %v644, %v645
    %v647 = vrot.slane %v646, 1
    %v648 = vmax.f32 %v646, %v647
    %v649 = vsel %vm606, %v604, -inf
    %v650 = vrot.slane %v649, 4
    %v651 = vmax.f32 %v649, %v650
    %v652 = vrot.slane %v651, 2
    %v653 = vmax.f32 %v651, %v652
    %v654 = vrot.slane %v653, 1
    %v655 = vmax.f32 %v653, %v654
    %v656 = vsel %vm606, %v605, -inf
    %v657 = vrot.slane %v656, 4
    %v658 = vmax.f32 %v656, %v657
    %v659 = vrot.slane %v658, 2
    %v660 = vmax.f32 %v658, %v659
    %v661 = vrot.slane %v660, 1
    %v662 = vmax.f32 %v660, %v661
    %v663 = vsub.f32 %v598, %v613
    %v664 = vsub.f32 %v599, %v620
    %v665 = vsub.f32 %v600, %v627
    %v666 = vsub.f32 %v601, %v634
    %v667 = vsub.f32 %v602, %v641
    %v668 = vsub.f32 %v603, %v648
    %v669 = vsub.f32 %v604, %v655
    %v670 = vsub.f32 %v605, %v662
    %v671 = vmul.f32 %v663, 1.442695
    %v672 = vpow.pop %v671
    %v673 = vmul.f32 %v664, 1.442695
    %v674 = vpow.pop %v673
    %v675 = vmul.f32 %v665, 1.442695
    %v676 = vpow.pop %v675
    %v677 = vmul.f32 %v666, 1.442695
    %v678 = vpow.pop %v677
    %v679 = vmul.f32 %v667, 1.442695
    %v680 = vpow.pop %v679
    %v681 = vmul.f32 %v668, 1.442695
    %v682 = vpow.pop %v681
    %v683 = vmul.f32 %v669, 1.442695
    %v684 = vpow.pop %v683
    %v685 = vmul.f32 %v670, 1.442695
    %v686 = vpow.pop %v685
    %v687 = vsel %vm606, %v672, 0.0
    %v688 = vrot.slane %v687, 4
    %v689 = vadd.f32 %v687, %v688
    %v690 = vrot.slane %v689, 2
    %v691 = vadd.f32 %v689, %v690
    %v692 = vrot.slane %v691, 1
    %v693 = vadd.f32 %v691, %v692
    %v694 = vsel %vm606, %v674, 0.0
    %v695 = vrot.slane %v694, 4
    %v696 = vadd.f32 %v694, %v695
    %v697 = vrot.slane %v696, 2
    %v698 = vadd.f32 %v696, %v697
    %v699 = vrot.slane %v698, 1
    %v700 = vadd.f32 %v698, %v699
    %v701 = vsel %vm606, %v676, 0.0
    %v702 = vrot.slane %v701, 4
    %v703 = vadd.f32 %v701, %v702
    %v704 = vrot.slane %v703, 2
    %v705 = vadd.f32 %v703, %v704
    %v706 = vrot.slane %v705, 1
    %v707 = vadd.f32 %v705, %v706
    %v708 = vsel %vm606, %v678, 0.0
    %v709 = vrot.slane %v708, 4
    %v710 = vadd.f32 %v708, %v709
    %v711 = vrot.slane %v710, 2
    %v712 = vadd.f32 %v710, %v711
    %v713 = vrot.slane %v712, 1
    %v714 = vadd.f32 %v712, %v713
    %v715 = vsel %vm606, %v680, 0.0
    %v716 = vrot.slane %v715, 4
    %v717 = vadd.f32 %v715, %v716
    %v718 = vrot.slane %v717, 2
    %v719 = vadd.f32 %v717, %v718
    %v720 = vrot.slane %v719, 1
    %v721 = vadd.f32 %v719, %v720
    %v722 = vsel %vm606, %v682, 0.0
    %v723 = vrot.slane %v722, 4
    %v724 = vadd.f32 %v722, %v723
    %v725 = vrot.slane %v724, 2
    %v726 = vadd.f32 %v724, %v725
    %v727 = vrot.slane %v726, 1
    %v728 = vadd.f32 %v726, %v727
    %v729 = vsel %vm606, %v684, 0.0
    %v730 = vrot.slane %v729, 4
    %v731 = vadd.f32 %v729, %v730
    %v732 = vrot.slane %v731, 2
    %v733 = vadd.f32 %v731, %v732
    %v734 = vrot.slane %v733, 1
    %v735 = vadd.f32 %v733, %v734
    %v736 = vsel %vm606, %v686, 0.0
    %v737 = vrot.slane %v736, 4
    %v738 = vadd.f32 %v736, %v737
    %v739 = vrot.slane %v738, 2
    %v740 = vadd.f32 %v738, %v739
    %v741 = vrot.slane %v740, 1
    %v742 = vadd.f32 %v740, %v741
    %v743 = vrcp.pop %v693
    %v744 = vrcp.pop %v700
    %v745 = vrcp.pop %v707
    %v746 = vrcp.pop %v714
    %v747 = vrcp.pop %v721
    %v748 = vrcp.pop %v728
    %v749 = vrcp.pop %v735
    %v750 = vrcp.pop %v742
    %v751 = vmul.f32 %v672, %v743
    %v752 = vmul.f32 %v674, %v744
    %v753 = vmul.f32 %v676, %v745
    %v754 = vmul.f32 %v678, %v746
    %v755 = vmul.f32 %v680, %v747
    %v756 = vmul.f32 %v682, %v748
    %v757 = vmul.f32 %v684, %v749
    %v758 = vmul.f32 %v686, %v750
    %v759 = vpack.c.bf16 %v752, %v751
    %v760 = vpack.c.bf16 %v754, %v753
    %v761 = vpack.c.bf16 %v756, %v755
    %v762 = vpack.c.bf16 %v758, %v757
    %v763 = vld [vmem:[%s8] sm:$0x3]
    %v765 = vsel %vm606, %v759, 0
    %v768 = vsel %vm606, %v760, 0
    %v771 = vsel %vm606, %v761, 0
    %v774 = vsel %vm606, %v762, 0
    %vm776 = vcmask 1041408
    %v778 = vsel %vm776, %v763, 0
    %780 = vmatprep.subr.bf16.mxu0 0
    %781 = vmatpush1.bf16.msra.mxu0 0
    %782 = vmatprep.subr.bf16.mxu0 0
    %783 = vmatpush1.bf16.msra.mxu0 0
    %784 = vmatprep.subr.bf16.mxu0 0
    %785 = vmatpush1.bf16.msra.mxu0 0
    %786 = vmatprep.subr.bf16.mxu0 0
    %787 = vmatpush1.bf16.msra.mxu0 0
    %788 = vmatprep.subr.bf16.mxu0 0
    %789 = vmatpush1.bf16.msra.mxu0 0
    %790 = vmatprep.subr.bf16.mxu0 0
    %791 = vmatpush1.bf16.msra.mxu0 0
    %792 = vmatprep.subr.bf16.mxu0 0
    %793 = vmatpush1.bf16.msra.mxu0 0
    %794 = vmatprep.subr.bf16.mxu0 0
    %795 = vmatpush1.bf16.msra.mxu0 %v778
    %796 = vmatprep.subr.bf16.mxu0 0
    %797 = vmatpush2.bf16.msra.mxu0 0
    %798 = vmatprep.subr.bf16.mxu0 0
    %799 = vmatpush2.bf16.msra.mxu0 0
    %800 = vmatprep.subr.bf16.mxu0 0
    %801 = vmatpush2.bf16.msra.mxu0 0
    %802 = vmatprep.subr.bf16.mxu0 0
    %803 = vmatpush2.bf16.msra.mxu0 0
    %804 = vmatprep.subr.bf16.mxu0 0
    %805 = vmatpush2.bf16.msra.mxu0 0
    %806 = vmatprep.subr.bf16.mxu0 0
    %807 = vmatpush2.bf16.msra.mxu0 0
    %808 = vmatprep.subr.bf16.mxu0 0
    %809 = vmatpush2.bf16.msra.mxu0 0
    %810 = vmatprep.subr.bf16.mxu0 0
    %811 = vmatpush2.bf16.msra.mxu0 0
    %812 = vmatprep.mubr.bf16.mxu0 0
    %813 = vmatmul.mubr.bf16.gmra.mxu0 %v765
    %v814 = vpop.f32.mrf.mxu0
    %v815 = vadd.f32 0.0, %v814
    %v816 = vpop.f32.mrf.mxu0
    %v817 = vpop.f32.mrf.mxu0
    %v818 = vadd.f32 0.0, %v817
    %v819 = vpop.f32.mrf.mxu0
    %820 = vmatprep.mubr.bf16.mxu0 0
    %821 = vmatmul.mubr.bf16.gmra.mxu0 %v768
    %v822 = vpop.f32.mrf.mxu0
    %v823 = vadd.f32 0.0, %v822
    %v824 = vpop.f32.mrf.mxu0
    %v825 = vpop.f32.mrf.mxu0
    %v826 = vadd.f32 0.0, %v825
    %v827 = vpop.f32.mrf.mxu0
    %828 = vmatprep.mubr.bf16.mxu0 0
    %829 = vmatmul.mubr.bf16.gmra.mxu0 %v771
    %v830 = vpop.f32.mrf.mxu0
    %v831 = vadd.f32 0.0, %v830
    %v832 = vpop.f32.mrf.mxu0
    %v833 = vpop.f32.mrf.mxu0
    %v834 = vadd.f32 0.0, %v833
    %v835 = vpop.f32.mrf.mxu0
    %836 = vmatprep.mubr.bf16.mxu0 0
    %837 = vmatmul.mubr.bf16.gmra.mxu0 %v774
    %v838 = vpop.f32.mrf.mxu0
    %v839 = vadd.f32 0.0, %v838
    %v840 = vpop.f32.mrf.mxu0
    %v841 = vpop.f32.mrf.mxu0
    %v842 = vadd.f32 0.0, %v841
    %v843 = vpop.f32.mrf.mxu0
    %844 = vdwg.mxu0
    %v845 = vmul.f32 %v815, %v320
    %v846 = vmul.f32 %v818, %v323
    %v847 = vmul.f32 %v823, %v328
    %v848 = vmul.f32 %v826, %v331
    %v849 = vmul.f32 %v831, %v336
    %v850 = vmul.f32 %v834, %v339
    %v851 = vmul.f32 %v839, %v344
    %v852 = vmul.f32 %v842, %v347
    %v853 = vrot.slane %v845, 4
    %v854 = vadd.f32 %v845, %v853
    %v855 = vrot.slane %v854, 2
    %v856 = vadd.f32 %v854, %v855
    %v857 = vrot.slane %v856, 1
    %v858 = vadd.f32 %v856, %v857
    %v859 = vrot.slane %v846, 4
    %v860 = vadd.f32 %v846, %v859
    %v861 = vrot.slane %v860, 2
    %v862 = vadd.f32 %v860, %v861
    %v863 = vrot.slane %v862, 1
    %v864 = vadd.f32 %v862, %v863
    %v865 = vrot.slane %v847, 4
    %v866 = vadd.f32 %v847, %v865
    %v867 = vrot.slane %v866, 2
    %v868 = vadd.f32 %v866, %v867
    %v869 = vrot.slane %v868, 1
    %v870 = vadd.f32 %v868, %v869
    %v871 = vrot.slane %v848, 4
    %v872 = vadd.f32 %v848, %v871
    %v873 = vrot.slane %v872, 2
    %v874 = vadd.f32 %v872, %v873
    %v875 = vrot.slane %v874, 1
    %v876 = vadd.f32 %v874, %v875
    %v877 = vrot.slane %v849, 4
    %v878 = vadd.f32 %v849, %v877
    %v879 = vrot.slane %v878, 2
    %v880 = vadd.f32 %v878, %v879
    %v881 = vrot.slane %v880, 1
    %v882 = vadd.f32 %v880, %v881
    %v883 = vrot.slane %v850, 4
    %v884 = vadd.f32 %v850, %v883
    %v885 = vrot.slane %v884, 2
    %v886 = vadd.f32 %v884, %v885
    %v887 = vrot.slane %v886, 1
    %v888 = vadd.f32 %v886, %v887
    %v889 = vrot.slane %v851, 4
    %v890 = vadd.f32 %v851, %v889
    %v891 = vrot.slane %v890, 2
    %v892 = vadd.f32 %v890, %v891
    %v893 = vrot.slane %v892, 1
    %v894 = vadd.f32 %v892, %v893
    %v895 = vrot.slane %v852, 4
    %v896 = vadd.f32 %v852, %v895
    %v897 = vrot.slane %v896, 2
    %v898 = vadd.f32 %v896, %v897
    %v899 = vrot.slane %v898, 1
    %v900 = vadd.f32 %v898, %v899
    %vm909 = vcmask 1041409
    %v910 = vsel %vm909, %v864, %v858
    %vm911 = vcmask 1042434
    %v912 = vsel %vm911, %v870, %v910
    %vm913 = vcmask 1043459
    %v914 = vsel %vm913, %v876, %v912
    %vm915 = vcmask 1044484
    %v916 = vsel %vm915, %v882, %v914
    %vm917 = vcmask 1045509
    %v918 = vsel %vm917, %v888, %v916
    %vm919 = vcmask 1046534
    %v920 = vsel %vm919, %v894, %v918
    %vm921 = vcmask 1047559
    %v922 = vsel %vm921, %v900, %v920
    %924 = vst [vmem:[#allocation5] sm:$0xff] %v922
    // Predicated region
    $region42: #{tpu_custom_call.1} parent=1 // pred_check
      _
    $region43: #{tpu_custom_call.1} parent=1 // pred_check_branch
      %926 = sbr.rel (0) target = $region45
    $region44: #{tpu_custom_call.1} parent=1 // pred_region
      %s928 = ssub.s32 128, 128
      %929 = vsyncadd [#allocation4], %s928
      %s931 = sshll.u32 [#allocation5], 4
      %s932 = int_to_ptr.vmem [resolvable:$true] %s931
      %934 = dma.vmem_to_hbm [thread:$0]  %s932, 128, %s9, [#allocation4]
    $region45: #{tpu_custom_call.1} parent=1 // pred_fallthru
      _
    // Predicated region
    $region46: #{tpu_custom_call.1} parent=1 // pred_check
      _
    $region47: #{tpu_custom_call.1} parent=1 // pred_check_branch
      %936 = sbr.rel (0) target = $region49
    $region48: #{tpu_custom_call.1} parent=1 // pred_region
      %937 = dma.done [#allocation4], 128
    $region49: #{tpu_custom_call.1} parent=1 // pred_fallthru
      _
    %938 = vsyncpa [#allocation3], 1
    %939 = vsyncpa [#allocation4], 1

</llo_original>
